<compile_context>
chip_gen: v7x
topology: tpu7x:2x2x1
jax: 0.10.0
libtpu: 0.0.40
codegen_flags: <defaults>
</compile_context>

<pallas_src>
import functools

import jax
import jax.numpy as jnp
from jax import lax
from jax.experimental import pallas as pl
from jax.experimental.pallas import tpu as pltpu


# --------------------------------------- fused kernel ---------------------------------------
def fused_upsample_kernel(x_ref, w_ref, s_ref, t_ref, o_ref):
    # x_ref: (tile_h + 2, P)   padded, ones-augmented input rows for this tile (P = (W+2)*(Cin+1))
    # w_ref: (3, P, Ncol)      effective weight, Ncol = 2*2W*Cout, columns ordered (a, q, o)
    # s_ref/t_ref: (1, Ncol)   folded BN scale / shift (conv bias folded into shift)
    # o_ref: (tile_h, Ncol)    row i of the block holds output rows {2i, 2i+1}
    th = o_ref.shape[0]
    # One accumulated GEMM per window-row offset (3 total) — replaces the original
    # upconv matmul + 9 per-tap K=Cout matmuls and all intermediate relayouts.
    acc = jnp.dot(x_ref[0:th, :], w_ref[0], preferred_element_type=jnp.float32)
    acc = acc + jnp.dot(x_ref[1:th + 1, :], w_ref[1], preferred_element_type=jnp.float32)
    acc = acc + jnp.dot(x_ref[2:th + 2, :], w_ref[2], preferred_element_type=jnp.float32)
    # Fused BatchNorm (eval) + ReLU epilogue.
    y = acc * s_ref[...] + t_ref[...]
    o_ref[...] = jnp.maximum(y, 0.0).astype(o_ref.dtype)


# ------------------------------ effective (composed) weight ------------------------------
def _build_effective_weight(wt, bt, w3, W):
    """Compose ConvTranspose2d(k=2,s=2) with Conv2d(3x3, SAME) into one banded matrix.

    Returns w_eff with shape (3, (W+2)*(Cin+1), 4*W*Cout): the linear map from a 3-row window of
    the zero-padded, ones-augmented input to one output row-slab (output rows {2i, 2i+1}), with
    output columns ordered (row-parity a, output col q, out channel o).
    """
    Cin, Cout = wt.shape[0], wt.shape[1]

    def window_to_rows(win):                       # win: (3, W+2, Cin+1) -> (2, 2W, Cout)
        xw, ones = win[:, :, :Cin], win[:, :, Cin]
        # up[2*dr + a, 2*wp + b, o] = sum_ci xw[dr, wp, ci] * wt[ci, o, a, b] + ones[dr, wp] * bt[o]
        up = jnp.einsum("rwi,ioab->rawbo", xw, wt) + ones[:, None, :, None, None] * bt
        up = up.reshape(6, 2 * (W + 2), Cout)
        # Window row dr is padded-input row i+dr -> up rows 2i-2+(2dr+a); the 3x3 conv for output
        # rows {2i, 2i+1} touches up rows 2i-1..2i+2 and up cols -1..2W -> slice [1:5], [1:2W+3].
        up = up[1:5, 1:2 * W + 3, :]               # (4, 2W+2, Cout)
        y = jnp.zeros((2, 2 * W, Cout), jnp.float32)
        for dy in range(3):
            for dx in range(3):
                y = y + jnp.einsum("aqc,co->aqo", up[dy:dy + 2, dx:dx + 2 * W, :], w3[dy, dx])
        return y

    P = (W + 2) * (Cin + 1)
    eye = jnp.eye(3 * P, dtype=jnp.float32).reshape(3 * P, 3, W + 2, Cin + 1)
    w_eff = jax.vmap(window_to_rows)(eye)          # (3P, 2, 2W, Cout) — probe the linear map
    return w_eff.reshape(3, P, 4 * W * Cout)


# ----------------------------------------- wrapper -----------------------------------------
@functools.partial(jax.jit, static_argnames=("tile_h",))
def upsample_forward(x_nchw, params, *, tile_h=None):
    """Equivalent of UpSample.forward.  Input/output are NCHW (PyTorch convention)."""
    N, Cin, H, W = x_nchw.shape
    wt, bt, w3 = params["wt"], params["bt"], params["wc_hwio"]
    Cout = wt.shape[1]
    Ncol = 4 * W * Cout                 # lane-dense output width per input row (a, q, o) packed
    P = (W + 2) * (Cin + 1)

    if tile_h is None or H % tile_h != 0:
        tile_h = H                      # fall back: whole image as one row tile (no divisibility assert)
    n_t = H // tile_h

    # ---- wrapper-side prep (small input only; XLA fuses these; in practice the weight/scale
    # ---- tensors below would be precomputed once per weight update) ----
    x_nhwc = jnp.transpose(x_nchw, (0, 2, 3, 1))
    ones = jnp.ones(x_nhwc.shape[:3] + (1,), x_nhwc.dtype)          # bias-carrier channel
    x_pad = jnp.pad(jnp.concatenate([x_nhwc, ones], axis=-1),
                    ((0, 0), (1, 1), (1, 1), (0, 0)))               # (N, H+2, W+2, Cin+1)
    # Overlapping row tiles with a 2-row halo (rows [t*tile_h, t*tile_h + tile_h + 2)).
    x_tiles = jnp.stack(
        [x_pad[:, t * tile_h: t * tile_h + tile_h + 2] for t in range(n_t)], axis=1
    ).reshape(N, n_t, tile_h + 2, P)

    w_eff = _build_effective_weight(wt, bt, w3, W)                   # (3, P, Ncol)

    eps = 1e-5
    scale = params["bn_gamma"] * lax.rsqrt(params["bn_var"] + eps)
    shift = params["bn_beta"] + scale * (params["bc"] - params["bn_mean"])
    scale_col = jnp.tile(scale, 4 * W).reshape(1, Ncol)              # per-(a,q,o) column layout
    shift_col = jnp.tile(shift, 4 * W).reshape(1, Ncol)

    out = pl.pallas_call(
        fused_upsample_kernel,
        out_shape=jax.ShapeDtypeStruct((N, H, Ncol), jnp.float32),
        grid_spec=pltpu.PrefetchScalarGridSpec(
            num_scalar_prefetch=0,
            grid=(N, n_t),
            in_specs=[
                pl.BlockSpec((None, None, tile_h + 2, P), lambda n, t: (n, t, 0, 0)),
                pl.BlockSpec((3, P, Ncol), lambda n, t: (0, 0, 0)),
                pl.BlockSpec((1, Ncol), lambda n, t: (0, 0)),
                pl.BlockSpec((1, Ncol), lambda n, t: (0, 0)),
            ],
            out_specs=pl.BlockSpec((None, tile_h, Ncol), lambda n, t: (n, t, 0)),
        ),
        compiler_params=pltpu.CompilerParams(
            dimension_semantics=("parallel", "parallel")),            # both axes megacore-shardable
    )(x_tiles, w_eff, scale_col, shift_col)

    # (N, H, 2*2W*Cout) -> (N, 2H, 2W, Cout) is a pure view reshape (no data movement);
    # only the NCHW boundary transpose remains (interface requirement).
    out_nhwc = out.reshape(N, 2 * H, 2 * W, Cout)
    return jnp.transpose(out_nhwc, (0, 3, 1, 2))


# ---------------------------------------- reference ----------------------------------------
def upsample_reference(x_nchw, params):
    x = jnp.transpose(x_nchw, (0, 2, 3, 1))  # NHWC
    N, H, W, Cin = x.shape
    wt, bt = params["wt"], params["bt"]
    Cout = wt.shape[1]
    # ConvTranspose2d k=2 s=2: up[n, 2h+a, 2w+b, o] = sum_c x[n,h,w,c] * wt[c,o,a,b] + bt[o]
    up = jnp.einsum("nhwc,coab->nhawbo", x, wt).reshape(N, 2 * H, 2 * W, Cout) + bt
    # Conv2d 3x3 SAME
    z = lax.conv_general_dilated(
        up, params["wc_hwio"], window_strides=(1, 1), padding="SAME",
        dimension_numbers=("NHWC", "HWIO", "NHWC"),
    ) + params["bc"]
    # BatchNorm (eval) + ReLU
    eps = 1e-5
    y = (z - params["bn_mean"]) * lax.rsqrt(params["bn_var"] + eps) * params["bn_gamma"] + params["bn_beta"]
    y = jnp.maximum(y, 0.0)
    return jnp.transpose(y, (0, 3, 1, 2))


# ------------------------------------------- main -------------------------------------------
if __name__ == "__main__":
    key = jax.random.PRNGKey(0)
    N, Cin, Cout, H, W = 2, 4, 8, 16, 16

    keys = jax.random.split(key, 8)
    x = jax.random.normal(keys[0], (N, Cin, H, W), jnp.float32)

    params = {
        # ConvTranspose2d weight (PyTorch layout [Cin, Cout, kH, kW]) and bias
        "wt": jax.random.normal(keys[1], (Cin, Cout, 2, 2), jnp.float32) * 0.3,
        "bt": jax.random.normal(keys[2], (Cout,), jnp.float32) * 0.1,
        # Conv2d 3x3 weight in HWIO layout [kH, kW, Cin, Cout], and bias
        "wc_hwio": jax.random.normal(keys[3], (3, 3, Cout, Cout), jnp.float32) * 0.15,
        "bc": jax.random.normal(keys[4], (Cout,), jnp.float32) * 0.1,
        # BatchNorm2d parameters / running stats (eval mode)
        "bn_gamma": 1.0 + 0.1 * jax.random.normal(keys[5], (Cout,), jnp.float32),
        "bn_beta": 0.1 * jax.random.normal(keys[6], (Cout,), jnp.float32),
        "bn_mean": 0.05 * jax.random.normal(keys[7], (Cout,), jnp.float32),
        "bn_var": jnp.abs(1.0 + 0.1 * jax.random.normal(keys[7], (Cout,), jnp.float32)),
    }

    out = upsample_forward(x, params, tile_h=8)   # 2 row-tiles per image -> grid (N, 2), both parallel
    out = jax.block_until_ready(out)

    ref = upsample_reference(x, params)
    assert out.shape == (N, Cout, 2 * H, 2 * W), out.shape
    max_err = float(jnp.max(jnp.abs(out - ref)))
    assert max_err < 1e-3, f"mismatch vs reference: {max_err}"

    print("KERNEL_OK")
</pallas_src>

<mosaic_0001>
module attributes {stable_mosaic.version = 11 : i64} {
  func.func @fused_upsample_kernel(%arg0: i32, %arg1: i32, %arg2: memref<1x1x10x90xf32, #tpu.memory_space<vmem>>, %arg3: memref<3x90x512xf32, #tpu.memory_space<vmem>>, %arg4: memref<1x512xf32, #tpu.memory_space<vmem>>, %arg5: memref<1x512xf32, #tpu.memory_space<vmem>>, %arg6: memref<1x8x512xf32, #tpu.memory_space<vmem>>) attributes {dimension_semantics = [#tpu.dimension_semantics<parallel>, #tpu.dimension_semantics<parallel>], iteration_bounds = array<i64: 2, 2>, scalar_prefetch = 0 : i64, scratch_operands = 0 : i64, tpu.core_type = #tpu.core_type<tc>, window_params = [{transform_indices = @transform_0, window_bounds = array<i64: 1, 1, 10, 90>}, {pipeline_mode = #tpu.pipeline_mode<synchronous>, transform_indices = @transform_1, window_bounds = array<i64: 3, 90, 512>}, {pipeline_mode = #tpu.pipeline_mode<synchronous>, transform_indices = @transform_2, window_bounds = array<i64: 1, 512>}, {pipeline_mode = #tpu.pipeline_mode<synchronous>, transform_indices = @transform_3, window_bounds = array<i64: 1, 512>}, {transform_indices = @transform_4, window_bounds = array<i64: 1, 8, 512>}]} {
    %c0 = arith.constant 0 : index
    %c0_0 = arith.constant 0 : index
    %c0_1 = arith.constant 0 : index
    %c0_2 = arith.constant 0 : index
    %0 = vector.load %arg2[%c0, %c0_0, %c0_1, %c0_2] : memref<1x1x10x90xf32, #tpu.memory_space<vmem>>, vector<1x1x8x90xf32>
    %1 = vector.shape_cast %0 : vector<1x1x8x90xf32> to vector<8x90xf32>
    %c0_3 = arith.constant 0 : index
    %c0_4 = arith.constant 0 : index
    %c0_5 = arith.constant 0 : index
    %2 = vector.load %arg3[%c0_3, %c0_4, %c0_5] : memref<3x90x512xf32, #tpu.memory_space<vmem>>, vector<1x90x512xf32>
    %3 = vector.shape_cast %2 : vector<1x90x512xf32> to vector<90x512xf32>
    %cst = arith.constant dense<0.000000e+00> : vector<8x512xf32>
    %4 = tpu.matmul %1, %3, %cst {dimension_numbers = #tpu.dot_dimension_numbers<[1], [0], [0], [1], [0, 0, 1, 1], [], []>} : vector<8x90xf32>, vector<90x512xf32>, vector<8x512xf32> -> vector<8x512xf32>
    %c0_6 = arith.constant 0 : index
    %c0_7 = arith.constant 0 : index
    %c1 = arith.constant 1 : index
    %c0_8 = arith.constant 0 : index
    %5 = vector.load %arg2[%c0_6, %c0_7, %c1, %c0_8] : memref<1x1x10x90xf32, #tpu.memory_space<vmem>>, vector<1x1x8x90xf32>
    %6 = vector.shape_cast %5 : vector<1x1x8x90xf32> to vector<8x90xf32>
    %c1_9 = arith.constant 1 : index
    %c0_10 = arith.constant 0 : index
    %c0_11 = arith.constant 0 : index
    %7 = vector.load %arg3[%c1_9, %c0_10, %c0_11] : memref<3x90x512xf32, #tpu.memory_space<vmem>>, vector<1x90x512xf32>
    %8 = vector.shape_cast %7 : vector<1x90x512xf32> to vector<90x512xf32>
    %cst_12 = arith.constant dense<0.000000e+00> : vector<8x512xf32>
    %9 = tpu.matmul %6, %8, %cst_12 {dimension_numbers = #tpu.dot_dimension_numbers<[1], [0], [0], [1], [0, 0, 1, 1], [], []>} : vector<8x90xf32>, vector<90x512xf32>, vector<8x512xf32> -> vector<8x512xf32>
    %10 = arith.addf %4, %9 : vector<8x512xf32>
    %c0_13 = arith.constant 0 : index
    %c0_14 = arith.constant 0 : index
    %c2 = arith.constant 2 : index
    %c0_15 = arith.constant 0 : index
    %11 = vector.load %arg2[%c0_13, %c0_14, %c2, %c0_15] : memref<1x1x10x90xf32, #tpu.memory_space<vmem>>, vector<1x1x8x90xf32>
    %12 = vector.shape_cast %11 : vector<1x1x8x90xf32> to vector<8x90xf32>
    %c2_16 = arith.constant 2 : index
    %c0_17 = arith.constant 0 : index
    %c0_18 = arith.constant 0 : index
    %13 = vector.load %arg3[%c2_16, %c0_17, %c0_18] : memref<3x90x512xf32, #tpu.memory_space<vmem>>, vector<1x90x512xf32>
    %14 = vector.shape_cast %13 : vector<1x90x512xf32> to vector<90x512xf32>
    %cst_19 = arith.constant dense<0.000000e+00> : vector<8x512xf32>
    %15 = tpu.matmul %12, %14, %cst_19 {dimension_numbers = #tpu.dot_dimension_numbers<[1], [0], [0], [1], [0, 0, 1, 1], [], []>} : vector<8x90xf32>, vector<90x512xf32>, vector<8x512xf32> -> vector<8x512xf32>
    %16 = arith.addf %10, %15 : vector<8x512xf32>
    %c0_20 = arith.constant 0 : index
    %c0_21 = arith.constant 0 : index
    %17 = vector.load %arg4[%c0_20, %c0_21] : memref<1x512xf32, #tpu.memory_space<vmem>>, vector<1x512xf32>
    %18 = vector.broadcast %17 : vector<1x512xf32> to vector<8x512xf32>
    %19 = arith.mulf %16, %18 : vector<8x512xf32>
    %c0_22 = arith.constant 0 : index
    %c0_23 = arith.constant 0 : index
    %20 = vector.load %arg5[%c0_22, %c0_23] : memref<1x512xf32, #tpu.memory_space<vmem>>, vector<1x512xf32>
    %21 = vector.broadcast %20 : vector<1x512xf32> to vector<8x512xf32>
    %22 = arith.addf %19, %21 : vector<8x512xf32>
    %cst_24 = arith.constant 0.000000e+00 : f32
    %23 = vector.broadcast %cst_24 : f32 to vector<8x512xf32>
    %24 = arith.maximumf %22, %23 : vector<8x512xf32>
    %c0_25 = arith.constant 0 : index
    %c0_26 = arith.constant 0 : index
    %c0_27 = arith.constant 0 : index
    %25 = vector.load %arg6[%c0_25, %c0_26, %c0_27] : memref<1x8x512xf32, #tpu.memory_space<vmem>>, vector<1x8x512xf32>
    %26 = vector.shape_cast %25 : vector<1x8x512xf32> to vector<8x512xf32>
    %27 = vector.shape_cast %24 : vector<8x512xf32> to vector<1x8x512xf32>
    tpu.vector_store %arg6[%c0_25, %c0_26, %c0_27], %27 {strides = array<i32>} : memref<1x8x512xf32, #tpu.memory_space<vmem>>, vector<1x8x512xf32>,
    return
  }
  func.func @transform_0(%arg0: i32, %arg1: i32) -> (i32, i32, i32, i32) {
    %c0_i32 = arith.constant 0 : i32
    %c0_i32_0 = arith.constant 0 : i32
    %c0_i32_1 = arith.constant 0 : i32
    return %arg0, %arg1, %c0_i32, %c0_i32_0 : i32, i32, i32, i32
  }
  func.func @transform_1(%arg0: i32, %arg1: i32) -> (i32, i32, i32) {
    %c0_i32 = arith.constant 0 : i32
    %c0_i32_0 = arith.constant 0 : i32
    %c0_i32_1 = arith.constant 0 : i32
    %c0_i32_2 = arith.constant 0 : i32
    return %c0_i32, %c0_i32_0, %c0_i32_1 : i32, i32, i32
  }
  func.func @transform_2(%arg0: i32, %arg1: i32) -> (i32, i32) {
    %c0_i32 = arith.constant 0 : i32
    %c0_i32_0 = arith.constant 0 : i32
    %c0_i32_1 = arith.constant 0 : i32
    return %c0_i32, %c0_i32_0 : i32, i32
  }
  func.func @transform_3(%arg0: i32, %arg1: i32) -> (i32, i32) {
    %c0_i32 = arith.constant 0 : i32
    %c0_i32_0 = arith.constant 0 : i32
    %c0_i32_1 = arith.constant 0 : i32
    return %c0_i32, %c0_i32_0 : i32, i32
  }
  func.func @transform_4(%arg0: i32, %arg1: i32) -> (i32, i32, i32) {
    %c0_i32 = arith.constant 0 : i32
    %c0_i32_0 = arith.constant 0 : i32
    return %arg0, %arg1, %c0_i32 : i32, i32, i32
  }
}

</mosaic_0001>

<llo_original>
// kernel: tile.13
$region0: #{tile.13}
  #allocation0 [shape = 's32[1]{0}', space=sflag, size = 0x4, scoped, tag = 'scoped memory for tile.13']
  %s0 = inlined_call_operand.vmem [shape: f32[8], index: 0, kind: input, shape index: {}]
  %s1 = inlined_call_operand.vmem [shape: f32[64,8], index: 1, kind: output, shape index: {}]
  // Predicated region
  $region2: #{tile.13} parent=0 // pred_check
    _
  $region3: #{tile.13} parent=0 // pred_check_branch
    %3 = sbr.rel (0) target = $region5
  $region4: #{tile.13} parent=0 // pred_region
    _
  $region5: #{tile.13} parent=0 // pred_fallthru
    _
  %v4 = vld [vmem:[%s0] ss:$0 sm:$0xff]
  %5 = vst [vmem:[%s1] sm:$0xff] %v4
  %s6 = scalar_lea.vmem %s1, 8
  %7 = vst [vmem:[%s6] sm:$0xff] %v4
  %s8 = scalar_lea.vmem %s1, 16
  %9 = vst [vmem:[%s8] sm:$0xff] %v4
  %s10 = scalar_lea.vmem %s1, 24
  %11 = vst [vmem:[%s10] sm:$0xff] %v4
  %s12 = scalar_lea.vmem %s1, 32
  %13 = vst [vmem:[%s12] sm:$0xff] %v4
  %s14 = scalar_lea.vmem %s1, 40
  %15 = vst [vmem:[%s14] sm:$0xff] %v4
  %s16 = scalar_lea.vmem %s1, 48
  %17 = vst [vmem:[%s16] sm:$0xff] %v4
  %s18 = scalar_lea.vmem %s1, 56
  %19 = vst [vmem:[%s18] sm:$0xff] %v4

// kernel: tile.14
$region0: #{tile.14}
  %s0 = inlined_call_operand.vmem [shape: f32[64,8], index: 0, kind: input, shape index: {}]
  %s1 = inlined_call_operand.vmem [shape: f32[1,512], index: 1, kind: output, shape index: {}]
  $region1: #{tile.14} parent=0
    #allocation0 [shape = 'u8[16384]{0}', space=vmem, size = 0x4000, scoped, tag = 'scoped mem for output reshape']
    %s2 = smov 3
    %v3 = vld [vmem:[%s0] ss:$16 sm:%s2]
    %s4 = smov 12
    %v5 = vld [vmem:[%s0] ss:$16 sm:%s4]
    %vm6 = vcmask 1043458
    %v7 = vsel %vm6, %v5, %v3
    %vm8 = vcmask 64512
    %9 = vst.msk [vmem:[#allocation0] ss:$8 sm:$0xf] %vm8, %v7
    %s10 = scalar_lea.vmem %s0, 15
    %s11 = smov 3
    %v12 = vld [vmem:[%s10] ss:$16 sm:%s11]
    %s13 = scalar_lea.vmem %s0, 15
    %s14 = smov 12
    %v15 = vld [vmem:[%s13] ss:$16 sm:%s14]
    %vm16 = vcmask 1043458
    %v17 = vsel %vm16, %v15, %v12
    %18 = vrot.lane.b32.xlu0 %v17, 120
    %v19 = vpop.permute.xlu0 %18
    %vm20 = vcmask 1048512
    %21 = vst.msk [vmem:[#allocation0] ss:$8 sm:$0xf] %vm20, %v19
    %s22 = scalar_lea.vmem %s0, 14
    %s23 = smov 3
    %v24 = vld [vmem:[%s22] ss:$16 sm:%s23]
    %s25 = scalar_lea.vmem %s0, 14
    %s26 = smov 12
    %v27 = vld [vmem:[%s25] ss:$16 sm:%s26]
    %vm28 = vcmask 1043458
    %v29 = vsel %vm28, %v27, %v24
    %30 = vrot.lane.b32.xlu0 %v29, 112
    %v31 = vpop.permute.xlu0 %30
    %vm32 = vcmask 982912
    %33 = vst.msk [vmem:[#allocation0] ss:$8 sm:$0xf] %vm32, %v31
    %s34 = scalar_lea.vmem %s0, 13
    %s35 = smov 3
    %v36 = vld [vmem:[%s34] ss:$16 sm:%s35]
    %s37 = scalar_lea.vmem %s0, 13
    %s38 = smov 12
    %v39 = vld [vmem:[%s37] ss:$16 sm:%s38]
    %vm40 = vcmask 1043458
    %v41 = vsel %vm40, %v39, %v36
    %42 = vrot.lane.b32.xlu0 %v41, 104
    %v43 = vpop.permute.xlu0 %42
    %vm44 = vcmask 917312
    %45 = vst.msk [vmem:[#allocation0] ss:$8 sm:$0xf] %vm44, %v43
    %s46 = scalar_lea.vmem %s0, 12
    %s47 = smov 3
    %v48 = vld [vmem:[%s46] ss:$16 sm:%s47]
    %s49 = scalar_lea.vmem %s0, 12
    %s50 = smov 12
    %v51 = vld [vmem:[%s49] ss:$16 sm:%s50]
    %vm52 = vcmask 1043458
    %v53 = vsel %vm52, %v51, %v48
    %54 = vrot.lane.b32.xlu0 %v53, 96
    %v55 = vpop.permute.xlu0 %54
    %vm56 = vcmask 851712
    %57 = vst.msk [vmem:[#allocation0] ss:$8 sm:$0xf] %vm56, %v55
    %s58 = scalar_lea.vmem %s0, 11
    %s59 = smov 3
    %v60 = vld [vmem:[%s58] ss:$16 sm:%s59]
    %s61 = scalar_lea.vmem %s0, 11
    %s62 = smov 12
    %v63 = vld [vmem:[%s61] ss:$16 sm:%s62]
    %vm64 = vcmask 1043458
    %v65 = vsel %vm64, %v63, %v60
    %66 = vrot.lane.b32.xlu0 %v65, 88
    %v67 = vpop.permute.xlu0 %66
    %vm68 = vcmask 786112
    %69 = vst.msk [vmem:[#allocation0] ss:$8 sm:$0xf] %vm68, %v67
    %s70 = scalar_lea.vmem %s0, 10
    %s71 = smov 3
    %v72 = vld [vmem:[%s70] ss:$16 sm:%s71]
    %s73 = scalar_lea.vmem %s0, 10
    %s74 = smov 12
    %v75 = vld [vmem:[%s73] ss:$16 sm:%s74]
    %vm76 = vcmask 1043458
    %v77 = vsel %vm76, %v75, %v72
    %78 = vrot.lane.b32.xlu0 %v77, 80
    %v79 = vpop.permute.xlu0 %78
    %vm80 = vcmask 720512
    %81 = vst.msk [vmem:[#allocation0] ss:$8 sm:$0xf] %vm80, %v79
    %s82 = scalar_lea.vmem %s0, 9
    %s83 = smov 3
    %v84 = vld [vmem:[%s82] ss:$16 sm:%s83]
    %s85 = scalar_lea.vmem %s0, 9
    %s86 = smov 12
    %v87 = vld [vmem:[%s85] ss:$16 sm:%s86]
    %vm88 = vcmask 1043458
    %v89 = vsel %vm88, %v87, %v84
    %90 = vrot.lane.b32.xlu0 %v89, 72
    %v91 = vpop.permute.xlu0 %90
    %vm92 = vcmask 654912
    %93 = vst.msk [vmem:[#allocation0] ss:$8 sm:$0xf] %vm92, %v91
    %s94 = scalar_lea.vmem %s0, 8
    %s95 = smov 3
    %v96 = vld [vmem:[%s94] ss:$16 sm:%s95]
    %s97 = scalar_lea.vmem %s0, 8
    %s98 = smov 12
    %v99 = vld [vmem:[%s97] ss:$16 sm:%s98]
    %vm100 = vcmask 1043458
    %v101 = vsel %vm100, %v99, %v96
    %102 = vrot.lane.b32.xlu0 %v101, 64
    %v103 = vpop.permute.xlu0 %102
    %vm104 = vcmask 589312
    %105 = vst.msk [vmem:[#allocation0] ss:$8 sm:$0xf] %vm104, %v103
    %s106 = scalar_lea.vmem %s0, 7
    %s107 = smov 3
    %v108 = vld [vmem:[%s106] ss:$16 sm:%s107]
    %s109 = scalar_lea.vmem %s0, 7
    %s110 = smov 12
    %v111 = vld [vmem:[%s109] ss:$16 sm:%s110]
    %vm112 = vcmask 1043458
    %v113 = vsel %vm112, %v111, %v108
    %114 = vrot.lane.b32.xlu0 %v113, 56
    %v115 = vpop.permute.xlu0 %114
    %vm116 = vcmask 523712
    %117 = vst.msk [vmem:[#allocation0] ss:$8 sm:$0xf] %vm116, %v115
    %s118 = scalar_lea.vmem %s0, 6
    %s119 = smov 3
    %v120 = vld [vmem:[%s118] ss:$16 sm:%s119]
    %s121 = scalar_lea.vmem %s0, 6
    %s122 = smov 12
    %v123 = vld [vmem:[%s121] ss:$16 sm:%s122]
    %vm124 = vcmask 1043458
    %v125 = vsel %vm124, %v123, %v120
    %126 = vrot.lane.b32.xlu0 %v125, 48
    %v127 = vpop.permute.xlu0 %126
    %vm128 = vcmask 458112
    %129 = vst.msk [vmem:[#allocation0] ss:$8 sm:$0xf] %vm128, %v127
    %s130 = scalar_lea.vmem %s0, 5
    %s131 = smov 3
    %v132 = vld [vmem:[%s130] ss:$16 sm:%s131]
    %s133 = scalar_lea.vmem %s0, 5
    %s134 = smov 12
    %v135 = vld [vmem:[%s133] ss:$16 sm:%s134]
    %vm136 = vcmask 1043458
    %v137 = vsel %vm136, %v135, %v132
    %138 = vrot.lane.b32.xlu0 %v137, 40
    %v139 = vpop.permute.xlu0 %138
    %vm140 = vcmask 392512
    %141 = vst.msk [vmem:[#allocation0] ss:$8 sm:$0xf] %vm140, %v139
    %s142 = scalar_lea.vmem %s0, 4
    %s143 = smov 3
    %v144 = vld [vmem:[%s142] ss:$16 sm:%s143]
    %s145 = scalar_lea.vmem %s0, 4
    %s146 = smov 12
    %v147 = vld [vmem:[%s145] ss:$16 sm:%s146]
    %vm148 = vcmask 1043458
    %v149 = vsel %vm148, %v147, %v144
    %150 = vrot.lane.b32.xlu0 %v149, 32
    %v151 = vpop.permute.xlu0 %150
    %vm152 = vcmask 326912
    %153 = vst.msk [vmem:[#allocation0] ss:$8 sm:$0xf] %vm152, %v151
    %s154 = scalar_lea.vmem %s0, 3
    %s155 = smov 3
    %v156 = vld [vmem:[%s154] ss:$16 sm:%s155]
    %s157 = scalar_lea.vmem %s0, 3
    %s158 = smov 12
    %v159 = vld [vmem:[%s157] ss:$16 sm:%s158]
    %vm160 = vcmask 1043458
    %v161 = vsel %vm160, %v159, %v156
    %162 = vrot.lane.b32.xlu0 %v161, 24
    %v163 = vpop.permute.xlu0 %162
    %vm164 = vcmask 261312
    %165 = vst.msk [vmem:[#allocation0] ss:$8 sm:$0xf] %vm164, %v163
    %s166 = scalar_lea.vmem %s0, 2
    %s167 = smov 3
    %v168 = vld [vmem:[%s166] ss:$16 sm:%s167]
    %s169 = scalar_lea.vmem %s0, 2
    %s170 = smov 12
    %v171 = vld [vmem:[%s169] ss:$16 sm:%s170]
    %vm172 = vcmask 1043458
    %v173 = vsel %vm172, %v171, %v168
    %174 = vrot.lane.b32.xlu0 %v173, 16
    %v175 = vpop.permute.xlu0 %174
    %vm176 = vcmask 195712
    %177 = vst.msk [vmem:[#allocation0] ss:$8 sm:$0xf] %vm176, %v175
    %s178 = scalar_lea.vmem %s0, 1
    %s179 = smov 3
    %v180 = vld [vmem:[%s178] ss:$16 sm:%s179]
    %s181 = scalar_lea.vmem %s0, 1
    %s182 = smov 12
    %v183 = vld [vmem:[%s181] ss:$16 sm:%s182]
    %vm184 = vcmask 1043458
    %v185 = vsel %vm184, %v183, %v180
    %186 = vrot.lane.b32.xlu0 %v185, 8
    %v187 = vpop.permute.xlu0 %186
    %vm188 = vcmask 130112
    %189 = vst.msk [vmem:[#allocation0] ss:$8 sm:$0xf] %vm188, %v187
    %s191 = sshllo.u32 0, 1
    %v193 = vld [vmem:[#allocation0] sm:%s191]
    %s194 = sshllo.u32 0, 1
    %195 = vst [vmem:[%s1] sm:%s194] %v193
    %s196 = scalar_lea.vmem [#allocation0], 8
    %v197 = vld [vmem:[%s196] sm:%s191]
    %s198 = sshllo.u32 0, 1
    %s199 = scalar_lea.vmem %s1, 1
    %200 = vst [vmem:[%s199] sm:%s198] %v197
    %s201 = scalar_lea.vmem [#allocation0], 16
    %v202 = vld [vmem:[%s201] sm:%s191]
    %s203 = sshllo.u32 0, 1
    %s204 = smul.addr 1, 2
    %s205 = scalar_lea.vmem %s1, %s204
    %206 = vst [vmem:[%s205] sm:%s203] %v202
    %s207 = scalar_lea.vmem [#allocation0], 24
    %v208 = vld [vmem:[%s207] sm:%s191]
    %s209 = sshllo.u32 0, 1
    %s210 = smul.addr 1, 3
    %s211 = scalar_lea.vmem %s1, %s210
    %212 = vst [vmem:[%s211] sm:%s209] %v208

// kernel: upsample_forward.1
$region0: #{upsample_forward.1}
  #allocation0 [shape = 'u32[]', space=smem, size = 0x4, offset = 0x4, fixed_abs, tag = 'smem constant byte address 0x4 - core index']
  #allocation1 [shape = 'u32[144,128]{1,0:T(1,128)}', space=vmem, size = 0x12000, scoped, tag = 'internal scratch']
  %s0 = inlined_call_operand.vmem [shape: f32[2,2,10,90], index: 0, kind: input, shape index: {}]
  %s1 = inlined_call_operand.vmem [shape: f32[3,90,512], index: 1, kind: input, shape index: {}]
  %s2 = inlined_call_operand.vmem [shape: f32[1,512], index: 2, kind: input, shape index: {}]
  %s3 = inlined_call_operand.vmem [shape: f32[1,512], index: 3, kind: input, shape index: {}]
  %s4 = inlined_call_operand.vmem [shape: f32[2,16,512], index: 4, kind: output, shape index: {}]
  %s5 = sld [smem:[#allocation0]]
  $region49: #{upsample_forward.1} parent=0
    _
  %s7 = ssub.s32 1, %s5
  %s8 = scalar_select 0, %s7, %s5
  loop: start=0, step=1, limit=6
  $region2: #{upsample_forward.1} parent=0 // loop_pre_header
    _
  $region3: #{upsample_forward.1} parent=0 // loop_header
    %s10 = sphi 0, %s14
    %p11 = scmp.ge.s32.totalorder %s10, 6
    %s17 = sphi 0, %s29
    %s18 = sphi 0, %s25
    %s19 = sphi 0, %s17
    %s20 = sphi 0, %s18
    %s21 = sphi 0, %s19
    %s22 = sphi 0, %s20
    %s34 = sphi 0, %s36
    %s37 = sphi 0, %s34
    %s38 = sphi 0, %s37
    %s54 = sphi 0, %s38
    %s58 = sphi 0, %s58
    %s60 = sphi 0, %s58
    %s61 = sphi 0, %s60
    %s75 = sphi 0, %s61
    %s79 = sphi 0, %s79
    %s81 = sphi 0, %s79
    %s82 = sphi 0, %s81
    %s96 = sphi 0, %s82
    %s100 = sphi 0, %s100
    %s102 = sphi 0, %s100
    %s103 = sphi 0, %s102
    %s117 = sphi 0, %s103
    %s125 = sphi 0, %s127
    %s128 = sphi 0, %s125
    %s129 = sphi 0, %s128
    %s145 = sphi 0, %s129
  $region4: #{upsample_forward.1} parent=0 // loop_header_branch
    %13 = sbr.rel (%p11) target = $region8
  $region5: #{upsample_forward.1} parent=0 // loop_body
    %s15 = ssub.s32 %s10, 1
    %s16 = ssub.s32 %s10, 2
    %s23 = sadd.s32 1, %s18
    %p24 = scmp.ge.s32.totalorder %s23, 2
    %s25 = scalar_select %p24, 0, %s23
    %s26 = sadd.s32 1, %s17
    %s27 = scalar_select %p24, %s26, %s17
    %p28 = scmp.ge.s32.totalorder %s27, 2
    %s29 = scalar_select %p28, 0, %s27
    %s30 = ssub.s32 %s17, %s29
    %s31 = ssub.s32 %s18, %s25
    %s32 = sor.u32 %s30, %s31
    %p33 = scmp.eq.s32.totalorder %s32, 0
    %s35 = sadd.s32 %s34, 1
    %s36 = scalar_select %p33, %s34, %s35
    %p39 = pneg %p33
    %p40 = scmp.eq.s32.totalorder %s10, 3
    %p41 = por %p39, %p40
    %p42 = scmp.ne.s32.totalorder %s34, %s37
    %p43 = scmp.eq.s32.totalorder %s10, 0
    %p44 = por %p42, %p43
    %p45 = scmp.ne.s32.totalorder %s34, %s37
    %p46 = scmp.eq.s32.totalorder %s15, 3
    %p47 = por %p45, %p46
    %p48 = scmp.ne.s32.totalorder %s37, %s38
    %p49 = scmp.eq.s32.totalorder %s15, 0
    %p50 = por %p48, %p49
    %p51 = scmp.ne.s32.totalorder %s37, %s38
    %p52 = scmp.eq.s32.totalorder %s16, 3
    %p53 = por %p51, %p52
    %p55 = scmp.ne.s32.totalorder %s38, %s54
    %p56 = scmp.eq.s32.totalorder %s16, 0
    %p57 = por %p55, %p56
    %s59 = sadd.s32 %s58, 1
    %p62 = scmp.eq.s32.totalorder %s10, 3
    %p63 = scmp.ne.s32.totalorder %s58, %s60
    %p64 = scmp.eq.s32.totalorder %s10, 0
    %p65 = por %p63, %p64
    %p66 = scmp.ne.s32.totalorder %s58, %s60
    %p67 = scmp.eq.s32.totalorder %s15, 3
    %p68 = por %p66, %p67
    %p69 = scmp.ne.s32.totalorder %s60, %s61
    %p70 = scmp.eq.s32.totalorder %s15, 0
    %p71 = por %p69, %p70
    %p72 = scmp.ne.s32.totalorder %s60, %s61
    %p73 = scmp.eq.s32.totalorder %s16, 3
    %p74 = por %p72, %p73
    %p76 = scmp.ne.s32.totalorder %s61, %s75
    %p77 = scmp.eq.s32.totalorder %s16, 0
    %p78 = por %p76, %p77
    %s80 = sadd.s32 %s79, 1
    %p83 = scmp.eq.s32.totalorder %s10, 3
    %p84 = scmp.ne.s32.totalorder %s79, %s81
    %p85 = scmp.eq.s32.totalorder %s10, 0
    %p86 = por %p84, %p85
    %p87 = scmp.ne.s32.totalorder %s79, %s81
    %p88 = scmp.eq.s32.totalorder %s15, 3
    %p89 = por %p87, %p88
    %p90 = scmp.ne.s32.totalorder %s81, %s82
    %p91 = scmp.eq.s32.totalorder %s15, 0
    %p92 = por %p90, %p91
    %p93 = scmp.ne.s32.totalorder %s81, %s82
    %p94 = scmp.eq.s32.totalorder %s16, 3
    %p95 = por %p93, %p94
    %p97 = scmp.ne.s32.totalorder %s82, %s96
    %p98 = scmp.eq.s32.totalorder %s16, 0
    %p99 = por %p97, %p98
    %s101 = sadd.s32 %s100, 1
    %p104 = scmp.eq.s32.totalorder %s10, 3
    %p105 = scmp.ne.s32.totalorder %s100, %s102
    %p106 = scmp.eq.s32.totalorder %s10, 0
    %p107 = por %p105, %p106
    %p108 = scmp.ne.s32.totalorder %s100, %s102
    %p109 = scmp.eq.s32.totalorder %s15, 3
    %p110 = por %p108, %p109
    %p111 = scmp.ne.s32.totalorder %s102, %s103
    %p112 = scmp.eq.s32.totalorder %s15, 0
    %p113 = por %p111, %p112
    %p114 = scmp.ne.s32.totalorder %s102, %s103
    %p115 = scmp.eq.s32.totalorder %s16, 3
    %p116 = por %p114, %p115
    %p118 = scmp.ne.s32.totalorder %s103, %s117
    %p119 = scmp.eq.s32.totalorder %s16, 0
    %p120 = por %p118, %p119
    %s121 = ssub.s32 %s17, %s29
    %s122 = ssub.s32 %s18, %s25
    %s123 = sor.u32 %s121, %s122
    %p124 = scmp.eq.s32.totalorder %s123, 0
    %s126 = sadd.s32 %s125, 1
    %s127 = scalar_select %p124, %s125, %s126
    %p130 = pneg %p124
    %p131 = scmp.eq.s32.totalorder %s10, 3
    %p132 = por %p130, %p131
    %p133 = scmp.ne.s32.totalorder %s125, %s128
    %p134 = scmp.eq.s32.totalorder %s10, 0
    %p135 = por %p133, %p134
    %p136 = scmp.ne.s32.totalorder %s125, %s128
    %p137 = scmp.eq.s32.totalorder %s15, 3
    %p138 = por %p136, %p137
    %p139 = scmp.ne.s32.totalorder %s128, %s129
    %p140 = scmp.eq.s32.totalorder %s15, 0
    %p141 = por %p139, %p140
    %p142 = scmp.ne.s32.totalorder %s128, %s129
    %p143 = scmp.eq.s32.totalorder %s16, 3
    %p144 = por %p142, %p143
    %p146 = scmp.ne.s32.totalorder %s129, %s145
    %p147 = scmp.eq.s32.totalorder %s16, 0
    %p148 = por %p146, %p147
    %p149 = scmp.le.s32.totalorder 1, %s10
    %p150 = scmp.lt.s32.totalorder %s10, 5
    %p151 = pnand %p149, %p150
    %p152 = pneg %p151
    // Predicated region
    $region9: #{upsample_forward.1} parent=5 // pred_check
      _
    $region10: #{upsample_forward.1} parent=5 // pred_check_branch
      %154 = sbr.rel (%p151) target = $region12
    $region11: #{upsample_forward.1} parent=5 // pred_region
      %s155 = ssub.s32 %s10, 1
      // Predicated region
      $region13: #{upsample_forward.1} parent=11 // pred_check
        %p156 = pneg %p71
      $region14: #{upsample_forward.1} parent=11 // pred_check_branch
        %158 = sbr.rel (%p156) target = $region16
      $region15: #{upsample_forward.1} parent=11 // pred_region
        _
      $region16: #{upsample_forward.1} parent=11 // pred_fallthru
        _
      // Predicated region
      $region17: #{upsample_forward.1} parent=11 // pred_check
        %p159 = pneg %p92
      $region18: #{upsample_forward.1} parent=11 // pred_check_branch
        %161 = sbr.rel (%p159) target = $region20
      $region19: #{upsample_forward.1} parent=11 // pred_region
        _
      $region20: #{upsample_forward.1} parent=11 // pred_fallthru
        _
      // Predicated region
      $region21: #{upsample_forward.1} parent=11 // pred_check
        %p162 = pneg %p113
      $region22: #{upsample_forward.1} parent=11 // pred_check_branch
        %164 = sbr.rel (%p162) target = $region24
      $region23: #{upsample_forward.1} parent=11 // pred_region
        _
      $region24: #{upsample_forward.1} parent=11 // pred_fallthru
        _
    $region12: #{upsample_forward.1} parent=5 // pred_fallthru
      _
    %p165 = scmp.lt.s32.totalorder %s10, 4
    // Predicated region
    $region25: #{upsample_forward.1} parent=5 // pred_check
      %p166 = pneg %p165
    $region26: #{upsample_forward.1} parent=5 // pred_check_branch
      %168 = sbr.rel (%p166) target = $region28
    $region27: #{upsample_forward.1} parent=5 // pred_region
      // Predicated region
      $region29: #{upsample_forward.1} parent=27 // pred_check
        %p169 = pneg %p44
      $region30: #{upsample_forward.1} parent=27 // pred_check_branch
        %171 = sbr.rel (%p169) target = $region32
      $region31: #{upsample_forward.1} parent=27 // pred_region
        %p172 = scmp.lt.s32.totalorder %s17, 1
        %s173 = scalar_select %p172, %s17, 1
        %p174 = scmp.lt.s32.totalorder %s18, 1
        %s175 = scalar_select %p174, %s18, 1
        %s176 = smul.addr %s175, 2
        %s177 = smul.addr %s173, 4
        %s178 = sadd.s32 %s176, %s177
        %s179 = smul.addr %s178, 8
        %s180 = scalar_lea.vmem %s0, %s179
      $region32: #{upsample_forward.1} parent=27 // pred_fallthru
        _
    $region28: #{upsample_forward.1} parent=5 // pred_fallthru
      _
    %p181 = scmp.le.s32.totalorder 1, %s10
    %p182 = scmp.lt.s32.totalorder %s10, 5
    %p183 = pnand %p181, %p182
    %p184 = pneg %p183
    // Predicated region
    $region33: #{upsample_forward.1} parent=5 // pred_check
      _
    $region34: #{upsample_forward.1} parent=5 // pred_check_branch
      %186 = sbr.rel (%p183) target = $region36
    $region35: #{upsample_forward.1} parent=5 // pred_region
      %s187 = ssub.s32 %s10, 1
      %p188 = scmp.lt.s32.totalorder %s19, 1
      %s189 = scalar_select %p188, %s19, 1
      %p190 = scmp.lt.s32.totalorder %s20, 1
      %s191 = scalar_select %p190, %s20, 1
      %s192 = smul.addr %s191, 2
      %s193 = smul.addr %s189, 4
      %s194 = sadd.s32 %s192, %s193
      %s195 = smul.addr %s194, 8
      %s196 = scalar_lea.vmem %s0, %s195
      %p197 = pneg %p50
      %p198 = pneg %p47
      %p199 = pneg %p71
      %p200 = pneg %p68
      %p201 = pneg %p92
      %p202 = pneg %p89
      %p203 = pneg %p113
      %p204 = pneg %p110
      %p205 = pneg %p141
      %p206 = pneg %p138
      %p207 = scmp.lt.s32.totalorder %s19, 1
      %s208 = scalar_select %p207, %s19, 1
      %p209 = scmp.lt.s32.totalorder %s20, 1
      %s210 = scalar_select %p209, %s20, 1
      %s211 = smul.addr %s210, 4
      %s212 = smul.addr %s208, 8
      %s213 = sadd.s32 %s211, %s212
      %s214 = smul.addr %s213, 8
      %s215 = scalar_lea.vmem %s4, %s214
      %p216 = scmp.lt.s32.totalorder %s19, 1
      %s217 = scalar_select %p216, %s19, 1
      %p218 = scmp.lt.s32.totalorder %s20, 1
      %s219 = scalar_select %p218, %s20, 1
      %s220 = smul.addr %s219, 2
      %s221 = smul.addr %s217, 4
      %s222 = sadd.s32 %s220, %s221
      %s223 = smul.addr %s222, 8
      %s224 = scalar_lea.vmem %s0, %s223
      %p225 = scmp.lt.s32.totalorder %s19, 1
      %s226 = scalar_select %p225, %s19, 1
      %p227 = scmp.lt.s32.totalorder %s20, 1
      %s228 = scalar_select %p227, %s20, 1
      %s229 = smul.addr %s228, 4
      %s230 = smul.addr %s226, 8
      %s231 = sadd.s32 %s229, %s230
      %s232 = smul.addr %s231, 8
      %s233 = scalar_lea.vmem %s4, %s232
      %v234 = vld [vmem:[%s224] sm:$0xff]
      %v235 = vld [vmem:[%s1] sm:$0xff]
      %v236 = vld [vmem:[%s1 + $0x8] sm:$0xff]
      %v237 = vld [vmem:[%s1 + $0x10] sm:$0xff]
      %v238 = vld [vmem:[%s1 + $0x18] sm:$0xff]
      %v239 = vld [vmem:[%s1 + $0x20] sm:$0xff]
      %v240 = vld [vmem:[%s1 + $0x28] sm:$0xff]
      %v241 = vld [vmem:[%s1 + $0x30] sm:$0xff]
      %v242 = vld [vmem:[%s1 + $0x38] sm:$0xff]
      %v243 = vld [vmem:[%s1 + $0x40] sm:$0xff]
      %v244 = vld [vmem:[%s1 + $0x48] sm:$0xff]
      %v245 = vld [vmem:[%s1 + $0x50] sm:$0xff]
      %v246 = vld [vmem:[%s1 + $0x58] sm:$0xff]
      %v247 = vld [vmem:[%s1 + $0x60] sm:$0xff]
      %v248 = vld [vmem:[%s1 + $0x68] sm:$0xff]
      %v249 = vld [vmem:[%s1 + $0x70] sm:$0xff]
      %v250 = vld [vmem:[%s1 + $0x78] sm:$0xff]
      %v251 = vld [vmem:[%s1 + $0x80] sm:$0xff]
      %v252 = vld [vmem:[%s1 + $0x88] sm:$0xff]
      %v253 = vld [vmem:[%s1 + $0x90] sm:$0xff]
      %v254 = vld [vmem:[%s1 + $0x98] sm:$0xff]
      %v255 = vld [vmem:[%s1 + $0xa0] sm:$0xff]
      %v256 = vld [vmem:[%s1 + $0xa8] sm:$0xff]
      %v257 = vld [vmem:[%s1 + $0xb0] sm:$0xff]
      %v258 = vld [vmem:[%s1 + $0xb8] sm:$0xff]
      %v259 = vld [vmem:[%s1 + $0xc0] sm:$0xff]
      %v260 = vld [vmem:[%s1 + $0xc8] sm:$0xff]
      %v261 = vld [vmem:[%s1 + $0xd0] sm:$0xff]
      %v262 = vld [vmem:[%s1 + $0xd8] sm:$0xff]
      %v263 = vld [vmem:[%s1 + $0xe0] sm:$0xff]
      %v264 = vld [vmem:[%s1 + $0xe8] sm:$0xff]
      %v265 = vld [vmem:[%s1 + $0xf0] sm:$0xff]
      %v266 = vld [vmem:[%s1 + $0xf8] sm:$0xff]
      %v267 = vld [vmem:[%s1 + $0x100] sm:$0xff]
      %v268 = vld [vmem:[%s1 + $0x108] sm:$0xff]
      %v269 = vld [vmem:[%s1 + $0x110] sm:$0xff]
      %v270 = vld [vmem:[%s1 + $0x118] sm:$0xff]
      %v271 = vld [vmem:[%s1 + $0x120] sm:$0xff]
      %v272 = vld [vmem:[%s1 + $0x128] sm:$0xff]
      %v273 = vld [vmem:[%s1 + $0x130] sm:$0xff]
      %v274 = vld [vmem:[%s1 + $0x138] sm:$0xff]
      %v275 = vld [vmem:[%s1 + $0x140] sm:$0xff]
      %v276 = vld [vmem:[%s1 + $0x148] sm:$0xff]
      %v277 = vld [vmem:[%s1 + $0x150] sm:$0xff]
      %v278 = vld [vmem:[%s1 + $0x158] sm:$0xff]
      %v279 = vld [vmem:[%s1 + $0x160] sm:$0x3]
      %v280 = vld [vmem:[%s1 + $0x168] sm:$0x3]
      %v281 = vld [vmem:[%s1 + $0x170] sm:$0x3]
      %v282 = vld [vmem:[%s1 + $0x178] sm:$0x3]
      %v283 = vld [vmem:[%s224 + $0x1] sm:$0xff]
      %s284 = scalar_lea.vmem %s1, 384
      %v285 = vld [vmem:[%s284] sm:$0xff]
      %v286 = vld [vmem:[%s284 + $0x8] sm:$0xff]
      %v287 = vld [vmem:[%s284 + $0x10] sm:$0xff]
      %v288 = vld [vmem:[%s284 + $0x18] sm:$0xff]
      %v289 = vld [vmem:[%s284 + $0x20] sm:$0xff]
      %v290 = vld [vmem:[%s284 + $0x28] sm:$0xff]
      %v291 = vld [vmem:[%s284 + $0x30] sm:$0xff]
      %v292 = vld [vmem:[%s284 + $0x38] sm:$0xff]
      %v293 = vld [vmem:[%s284 + $0x40] sm:$0xff]
      %v294 = vld [vmem:[%s284 + $0x48] sm:$0xff]
      %v295 = vld [vmem:[%s284 + $0x50] sm:$0xff]
      %v296 = vld [vmem:[%s284 + $0x58] sm:$0xff]
      %v297 = vld [vmem:[%s284 + $0x60] sm:$0xff]
      %v298 = vld [vmem:[%s284 + $0x68] sm:$0xff]
      %v299 = vld [vmem:[%s284 + $0x70] sm:$0xff]
      %v300 = vld [vmem:[%s284 + $0x78] sm:$0xff]
      %v301 = vld [vmem:[%s284 + $0x80] sm:$0xff]
      %v302 = vld [vmem:[%s284 + $0x88] sm:$0xff]
      %v303 = vld [vmem:[%s284 + $0x90] sm:$0xff]
      %v304 = vld [vmem:[%s284 + $0x98] sm:$0xff]
      %v305 = vld [vmem:[%s284 + $0xa0] sm:$0xff]
      %v306 = vld [vmem:[%s284 + $0xa8] sm:$0xff]
      %v307 = vld [vmem:[%s284 + $0xb0] sm:$0xff]
      %v308 = vld [vmem:[%s284 + $0xb8] sm:$0xff]
      %v309 = vld [vmem:[%s284 + $0xc0] sm:$0xff]
      %v310 = vld [vmem:[%s284 + $0xc8] sm:$0xff]
      %v311 = vld [vmem:[%s284 + $0xd0] sm:$0xff]
      %v312 = vld [vmem:[%s284 + $0xd8] sm:$0xff]
      %v313 = vld [vmem:[%s284 + $0xe0] sm:$0xff]
      %v314 = vld [vmem:[%s284 + $0xe8] sm:$0xff]
      %v315 = vld [vmem:[%s284 + $0xf0] sm:$0xff]
      %v316 = vld [vmem:[%s284 + $0xf8] sm:$0xff]
      %v317 = vld [vmem:[%s284 + $0x100] sm:$0xff]
      %v318 = vld [vmem:[%s284 + $0x108] sm:$0xff]
      %v319 = vld [vmem:[%s284 + $0x110] sm:$0xff]
      %v320 = vld [vmem:[%s284 + $0x118] sm:$0xff]
      %v321 = vld [vmem:[%s284 + $0x120] sm:$0xff]
      %v322 = vld [vmem:[%s284 + $0x128] sm:$0xff]
      %v323 = vld [vmem:[%s284 + $0x130] sm:$0xff]
      %v324 = vld [vmem:[%s284 + $0x138] sm:$0xff]
      %v325 = vld [vmem:[%s284 + $0x140] sm:$0xff]
      %v326 = vld [vmem:[%s284 + $0x148] sm:$0xff]
      %v327 = vld [vmem:[%s284 + $0x150] sm:$0xff]
      %v328 = vld [vmem:[%s284 + $0x158] sm:$0xff]
      %v329 = vld [vmem:[%s284 + $0x160] sm:$0x3]
      %v330 = vld [vmem:[%s284 + $0x168] sm:$0x3]
      %v331 = vld [vmem:[%s284 + $0x170] sm:$0x3]
      %v332 = vld [vmem:[%s284 + $0x178] sm:$0x3]
      %vm333 = vcmask 736256
      %v335 = vsel %vm333, %v283, 0
      %vm337 = vcmask 1041408
      %v339 = vsel %vm337, %v329, 0
      %v342 = vsel %vm337, %v330, 0
      %v345 = vsel %vm337, %v331, 0
      %v348 = vsel %vm337, %v332, 0
      %350 = vmatprep.subr.mxu0 %v286
      %351 = vmatpush1.msra.mxu0 %v285
      %352 = vmatprep.subr.mxu0 %v290
      %353 = vmatpush1.msra.mxu0 %v289
      %354 = vmatprep.subr.mxu0 %v294
      %355 = vmatpush1.msra.mxu0 %v293
      %356 = vmatprep.subr.mxu0 %v298
      %357 = vmatpush1.msra.mxu0 %v297
      %358 = vmatprep.subr.mxu0 %v302
      %359 = vmatpush1.msra.mxu0 %v301
      %360 = vmatprep.subr.mxu0 %v306
      %361 = vmatpush1.msra.mxu0 %v305
      %362 = vmatprep.subr.mxu0 %v310
      %363 = vmatpush1.msra.mxu0 %v309
      %364 = vmatprep.subr.mxu0 %v314
      %365 = vmatpush1.msra.mxu0 %v313
      %366 = vmatprep.subr.mxu0 %v318
      %367 = vmatpush1.msra.mxu0 %v317
      %368 = vmatprep.subr.mxu0 %v322
      %369 = vmatpush1.msra.mxu0 %v321
      %370 = vmatprep.subr.mxu0 %v326
      %371 = vmatpush1.msra.mxu0 %v325
      %372 = vmatprep.subr.mxu0 %v342
      %373 = vmatpush1.msra.mxu0 %v339
      %374 = vmatprep.subr.mxu0 0.0
      %375 = vmatpush1.msra.mxu0 0.0
      %376 = vmatprep.subr.mxu0 0.0
      %377 = vmatpush1.msra.mxu0 0.0
      %378 = vmatprep.subr.mxu0 0.0
      %379 = vmatpush1.msra.mxu0 0.0
      %380 = vmatprep.subr.mxu0 0.0
      %381 = vmatpush1.msra.mxu0 0.0
      %382 = vmatprep.subr.mxu0 0.0
      %383 = vmatpush1.msra.mxu0 0.0
      %384 = vmatprep.subr.mxu0 0.0
      %385 = vmatpush1.msra.mxu0 0.0
      %386 = vmatprep.subr.mxu0 0.0
      %387 = vmatpush1.msra.mxu0 0.0
      %388 = vmatprep.subr.mxu0 0.0
      %389 = vmatpush1.msra.mxu0 0.0
      %390 = vmatprep.subr.mxu0 0.0
      %391 = vmatpush1.msra.mxu0 0.0
      %392 = vmatprep.subr.mxu0 0.0
      %393 = vmatpush1.msra.mxu0 0.0
      %394 = vmatprep.subr.mxu0 0.0
      %395 = vmatpush1.msra.mxu0 0.0
      %396 = vmatprep.subr.mxu0 0.0
      %397 = vmatpush1.msra.mxu0 0.0
      %398 = vmatprep.subr.mxu0 0.0
      %399 = vmatpush1.msra.mxu0 0.0
      %400 = vmatprep.subr.mxu0 0.0
      %401 = vmatpush1.msra.mxu0 0.0
      %402 = vmatprep.subr.mxu0 0.0
      %403 = vmatpush1.msra.mxu0 0.0
      %404 = vmatprep.subr.mxu0 0.0
      %405 = vmatpush1.msra.mxu0 0.0
      %406 = vmatprep.subr.mxu0 0.0
      %407 = vmatpush1.msra.mxu0 0.0
      %408 = vmatprep.subr.mxu0 0.0
      %409 = vmatpush1.msra.mxu0 0.0
      %410 = vmatprep.subr.mxu0 0.0
      %411 = vmatpush1.msra.mxu0 0.0
      %412 = vmatprep.subr.mxu0 0.0
      %413 = vmatpush1.msra.mxu0 0.0
      %414 = vmatprep.mubr.f32.mxu0 0.0
      %415 = vmatmul.mubr.f32.gmra.mrb[0].mxu0 %v335
      %v416 = vpop.f32.mrb[0].mxu0
      %v417 = vadd.f32 0.0, %v416
      %v418 = vpop.f32.mrb[0].mxu0
      %v419 = vadd.f32 0.0, %v418
      %420 = vdwg.mxu0
      %421 = vmatprep.subr.mxu0 %v288
      %422 = vmatpush1.msra.mxu0 %v287
      %423 = vmatprep.subr.mxu0 %v292
      %424 = vmatpush1.msra.mxu0 %v291
      %425 = vmatprep.subr.mxu0 %v296
      %426 = vmatpush1.msra.mxu0 %v295
      %427 = vmatprep.subr.mxu0 %v300
      %428 = vmatpush1.msra.mxu0 %v299
      %429 = vmatprep.subr.mxu0 %v304
      %430 = vmatpush1.msra.mxu0 %v303
      %431 = vmatprep.subr.mxu0 %v308
      %432 = vmatpush1.msra.mxu0 %v307
      %433 = vmatprep.subr.mxu0 %v312
      %434 = vmatpush1.msra.mxu0 %v311
      %435 = vmatprep.subr.mxu0 %v316
      %436 = vmatpush1.msra.mxu0 %v315
      %437 = vmatprep.subr.mxu0 %v320
      %438 = vmatpush1.msra.mxu0 %v319
      %439 = vmatprep.subr.mxu0 %v324
      %440 = vmatpush1.msra.mxu0 %v323
      %441 = vmatprep.subr.mxu0 %v328
      %442 = vmatpush1.msra.mxu0 %v327
      %443 = vmatprep.subr.mxu0 %v348
      %444 = vmatpush1.msra.mxu0 %v345
      %445 = vmatprep.subr.mxu0 0.0
      %446 = vmatpush1.msra.mxu0 0.0
      %447 = vmatprep.subr.mxu0 0.0
      %448 = vmatpush1.msra.mxu0 0.0
      %449 = vmatprep.subr.mxu0 0.0
      %450 = vmatpush1.msra.mxu0 0.0
      %451 = vmatprep.subr.mxu0 0.0
      %452 = vmatpush1.msra.mxu0 0.0
      %453 = vmatprep.subr.mxu0 0.0
      %454 = vmatpush1.msra.mxu0 0.0
      %455 = vmatprep.subr.mxu0 0.0
      %456 = vmatpush1.msra.mxu0 0.0
      %457 = vmatprep.subr.mxu0 0.0
      %458 = vmatpush1.msra.mxu0 0.0
      %459 = vmatprep.subr.mxu0 0.0
      %460 = vmatpush1.msra.mxu0 0.0
      %461 = vmatprep.subr.mxu0 0.0
      %462 = vmatpush1.msra.mxu0 0.0
      %463 = vmatprep.subr.mxu0 0.0
      %464 = vmatpush1.msra.mxu0 0.0
      %465 = vmatprep.subr.mxu0 0.0
      %466 = vmatpush1.msra.mxu0 0.0
      %467 = vmatprep.subr.mxu0 0.0
      %468 = vmatpush1.msra.mxu0 0.0
      %469 = vmatprep.subr.mxu0 0.0
      %470 = vmatpush1.msra.mxu0 0.0
      %471 = vmatprep.subr.mxu0 0.0
      %472 = vmatpush1.msra.mxu0 0.0
      %473 = vmatprep.subr.mxu0 0.0
      %474 = vmatpush1.msra.mxu0 0.0
      %475 = vmatprep.subr.mxu0 0.0
      %476 = vmatpush1.msra.mxu0 0.0
      %477 = vmatprep.subr.mxu0 0.0
      %478 = vmatpush1.msra.mxu0 0.0
      %479 = vmatprep.subr.mxu0 0.0
      %480 = vmatpush1.msra.mxu0 0.0
      %481 = vmatprep.subr.mxu0 0.0
      %482 = vmatpush1.msra.mxu0 0.0
      %483 = vmatprep.subr.mxu0 0.0
      %484 = vmatpush1.msra.mxu0 0.0
      %485 = vmatprep.mubr.f32.mxu0 0.0
      %486 = vmatmul.mubr.f32.gmra.mrb[0].mxu0 %v335
      %v487 = vpop.f32.mrb[0].mxu0
      %v488 = vadd.f32 0.0, %v487
      %v489 = vpop.f32.mrb[0].mxu0
      %v490 = vadd.f32 0.0, %v489
      %491 = vdwg.mxu0
      %v493 = vsel %vm333, %v234, 0
      %v496 = vsel %vm337, %v279, 0
      %v499 = vsel %vm337, %v280, 0
      %v502 = vsel %vm337, %v281, 0
      %v505 = vsel %vm337, %v282, 0
      %507 = vmatprep.subr.mxu0 %v236
      %508 = vmatpush1.msra.mxu0 %v235
      %509 = vmatprep.subr.mxu0 %v240
      %510 = vmatpush1.msra.mxu0 %v239
      %511 = vmatprep.subr.mxu0 %v244
      %512 = vmatpush1.msra.mxu0 %v243
      %513 = vmatprep.subr.mxu0 %v248
      %514 = vmatpush1.msra.mxu0 %v247
      %515 = vmatprep.subr.mxu0 %v252
      %516 = vmatpush1.msra.mxu0 %v251
      %517 = vmatprep.subr.mxu0 %v256
      %518 = vmatpush1.msra.mxu0 %v255
      %519 = vmatprep.subr.mxu0 %v260
      %520 = vmatpush1.msra.mxu0 %v259
      %521 = vmatprep.subr.mxu0 %v264
      %522 = vmatpush1.msra.mxu0 %v263
      %523 = vmatprep.subr.mxu0 %v268
      %524 = vmatpush1.msra.mxu0 %v267
      %525 = vmatprep.subr.mxu0 %v272
      %526 = vmatpush1.msra.mxu0 %v271
      %527 = vmatprep.subr.mxu0 %v276
      %528 = vmatpush1.msra.mxu0 %v275
      %529 = vmatprep.subr.mxu0 %v499
      %530 = vmatpush1.msra.mxu0 %v496
      %531 = vmatprep.subr.mxu0 0.0
      %532 = vmatpush1.msra.mxu0 0.0
      %533 = vmatprep.subr.mxu0 0.0
      %534 = vmatpush1.msra.mxu0 0.0
      %535 = vmatprep.subr.mxu0 0.0
      %536 = vmatpush1.msra.mxu0 0.0
      %537 = vmatprep.subr.mxu0 0.0
      %538 = vmatpush1.msra.mxu0 0.0
      %539 = vmatprep.subr.mxu0 0.0
      %540 = vmatpush1.msra.mxu0 0.0
      %541 = vmatprep.subr.mxu0 0.0
      %542 = vmatpush1.msra.mxu0 0.0
      %543 = vmatprep.subr.mxu0 0.0
      %544 = vmatpush1.msra.mxu0 0.0
      %545 = vmatprep.subr.mxu0 0.0
      %546 = vmatpush1.msra.mxu0 0.0
      %547 = vmatprep.subr.mxu0 0.0
      %548 = vmatpush1.msra.mxu0 0.0
      %549 = vmatprep.subr.mxu0 0.0
      %550 = vmatpush1.msra.mxu0 0.0
      %551 = vmatprep.subr.mxu0 0.0
      %552 = vmatpush1.msra.mxu0 0.0
      %553 = vmatprep.subr.mxu0 0.0
      %554 = vmatpush1.msra.mxu0 0.0
      %555 = vmatprep.subr.mxu0 0.0
      %556 = vmatpush1.msra.mxu0 0.0
      %557 = vmatprep.subr.mxu0 0.0
      %558 = vmatpush1.msra.mxu0 0.0
      %559 = vmatprep.subr.mxu0 0.0
      %560 = vmatpush1.msra.mxu0 0.0
      %561 = vmatprep.subr.mxu0 0.0
      %562 = vmatpush1.msra.mxu0 0.0
      %563 = vmatprep.subr.mxu0 0.0
      %564 = vmatpush1.msra.mxu0 0.0
      %565 = vmatprep.subr.mxu0 0.0
      %566 = vmatpush1.msra.mxu0 0.0
      %567 = vmatprep.subr.mxu0 0.0
      %568 = vmatpush1.msra.mxu0 0.0
      %569 = vmatprep.subr.mxu0 0.0
      %570 = vmatpush1.msra.mxu0 0.0
      %571 = vmatprep.mubr.f32.mxu0 0.0
      %572 = vmatmul.mubr.f32.gmra.mrb[0].mxu0 %v493
      %v573 = vpop.f32.mrb[0].mxu0
      %v574 = vadd.f32 %v417, %v573
      %v575 = vpop.f32.mrb[0].mxu0
      %v576 = vadd.f32 %v419, %v575
      %577 = vdwg.mxu0
      %578 = vmatprep.subr.mxu0 %v238
      %579 = vmatpush1.msra.mxu0 %v237
      %580 = vmatprep.subr.mxu0 %v242
      %581 = vmatpush1.msra.mxu0 %v241
      %582 = vmatprep.subr.mxu0 %v246
      %583 = vmatpush1.msra.mxu0 %v245
      %584 = vmatprep.subr.mxu0 %v250
      %585 = vmatpush1.msra.mxu0 %v249
      %586 = vmatprep.subr.mxu0 %v254
      %587 = vmatpush1.msra.mxu0 %v253
      %588 = vmatprep.subr.mxu0 %v258
      %589 = vmatpush1.msra.mxu0 %v257
      %590 = vmatprep.subr.mxu0 %v262
      %591 = vmatpush1.msra.mxu0 %v261
      %592 = vmatprep.subr.mxu0 %v266
      %593 = vmatpush1.msra.mxu0 %v265
      %594 = vmatprep.subr.mxu0 %v270
      %595 = vmatpush1.msra.mxu0 %v269
      %596 = vmatprep.subr.mxu0 %v274
      %597 = vmatpush1.msra.mxu0 %v273
      %598 = vmatprep.subr.mxu0 %v278
      %599 = vmatpush1.msra.mxu0 %v277
      %600 = vmatprep.subr.mxu0 %v505
      %601 = vmatpush1.msra.mxu0 %v502
      %602 = vmatprep.subr.mxu0 0.0
      %603 = vmatpush1.msra.mxu0 0.0
      %604 = vmatprep.subr.mxu0 0.0
      %605 = vmatpush1.msra.mxu0 0.0
      %606 = vmatprep.subr.mxu0 0.0
      %607 = vmatpush1.msra.mxu0 0.0
      %608 = vmatprep.subr.mxu0 0.0
      %609 = vmatpush1.msra.mxu0 0.0
      %610 = vmatprep.subr.mxu0 0.0
      %611 = vmatpush1.msra.mxu0 0.0
      %612 = vmatprep.subr.mxu0 0.0
      %613 = vmatpush1.msra.mxu0 0.0
      %614 = vmatprep.subr.mxu0 0.0
      %615 = vmatpush1.msra.mxu0 0.0
      %616 = vmatprep.subr.mxu0 0.0
      %617 = vmatpush1.msra.mxu0 0.0
      %618 = vmatprep.subr.mxu0 0.0
      %619 = vmatpush1.msra.mxu0 0.0
      %620 = vmatprep.subr.mxu0 0.0
      %621 = vmatpush1.msra.mxu0 0.0
      %622 = vmatprep.subr.mxu0 0.0
      %623 = vmatpush1.msra.mxu0 0.0
      %624 = vmatprep.subr.mxu0 0.0
      %625 = vmatpush1.msra.mxu0 0.0
      %626 = vmatprep.subr.mxu0 0.0
      %627 = vmatpush1.msra.mxu0 0.0
      %628 = vmatprep.subr.mxu0 0.0
      %629 = vmatpush1.msra.mxu0 0.0
      %630 = vmatprep.subr.mxu0 0.0
      %631 = vmatpush1.msra.mxu0 0.0
      %632 = vmatprep.subr.mxu0 0.0
      %633 = vmatpush1.msra.mxu0 0.0
      %634 = vmatprep.subr.mxu0 0.0
      %635 = vmatpush1.msra.mxu0 0.0
      %636 = vmatprep.subr.mxu0 0.0
      %637 = vmatpush1.msra.mxu0 0.0
      %638 = vmatprep.subr.mxu0 0.0
      %639 = vmatpush1.msra.mxu0 0.0
      %640 = vmatprep.subr.mxu0 0.0
      %641 = vmatpush1.msra.mxu0 0.0
      %642 = vmatprep.mubr.f32.mxu0 0.0
      %643 = vmatmul.mubr.f32.gmra.mrb[0].mxu0 %v493
      %v644 = vpop.f32.mrb[0].mxu0
      %v645 = vadd.f32 %v488, %v644
      %v646 = vpop.f32.mrb[0].mxu0
      %v647 = vadd.f32 %v490, %v646
      %648 = vdwg.mxu0
      %v649 = vld [vmem:[%s224 + $0x2] sm:$0xff]
      %s650 = scalar_lea.vmem %s1, 768
      %v651 = vld [vmem:[%s650] sm:$0xff]
      %v652 = vld [vmem:[%s650 + $0x8] sm:$0xff]
      %v653 = vld [vmem:[%s650 + $0x10] sm:$0xff]
      %v654 = vld [vmem:[%s650 + $0x18] sm:$0xff]
      %v655 = vld [vmem:[%s650 + $0x20] sm:$0xff]
      %v656 = vld [vmem:[%s650 + $0x28] sm:$0xff]
      %v657 = vld [vmem:[%s650 + $0x30] sm:$0xff]
      %v658 = vld [vmem:[%s650 + $0x38] sm:$0xff]
      %v659 = vld [vmem:[%s650 + $0x40] sm:$0xff]
      %v660 = vld [vmem:[%s650 + $0x48] sm:$0xff]
      %v661 = vld [vmem:[%s650 + $0x50] sm:$0xff]
      %v662 = vld [vmem:[%s650 + $0x58] sm:$0xff]
      %v663 = vld [vmem:[%s650 + $0x60] sm:$0xff]
      %v664 = vld [vmem:[%s650 + $0x68] sm:$0xff]
      %v665 = vld [vmem:[%s650 + $0x70] sm:$0xff]
      %v666 = vld [vmem:[%s650 + $0x78] sm:$0xff]
      %v667 = vld [vmem:[%s650 + $0x80] sm:$0xff]
      %v668 = vld [vmem:[%s650 + $0x88] sm:$0xff]
      %v669 = vld [vmem:[%s650 + $0x90] sm:$0xff]
      %v670 = vld [vmem:[%s650 + $0x98] sm:$0xff]
      %v671 = vld [vmem:[%s650 + $0xa0] sm:$0xff]
      %v672 = vld [vmem:[%s650 + $0xa8] sm:$0xff]
      %v673 = vld [vmem:[%s650 + $0xb0] sm:$0xff]
      %v674 = vld [vmem:[%s650 + $0xb8] sm:$0xff]
      %v675 = vld [vmem:[%s650 + $0xc0] sm:$0xff]
      %v676 = vld [vmem:[%s650 + $0xc8] sm:$0xff]
      %v677 = vld [vmem:[%s650 + $0xd0] sm:$0xff]
      %v678 = vld [vmem:[%s650 + $0xd8] sm:$0xff]
      %v679 = vld [vmem:[%s650 + $0xe0] sm:$0xff]
      %v680 = vld [vmem:[%s650 + $0xe8] sm:$0xff]
      %v681 = vld [vmem:[%s650 + $0xf0] sm:$0xff]
      %v682 = vld [vmem:[%s650 + $0xf8] sm:$0xff]
      %v683 = vld [vmem:[%s650 + $0x100] sm:$0xff]
      %v684 = vld [vmem:[%s650 + $0x108] sm:$0xff]
      %v685 = vld [vmem:[%s650 + $0x110] sm:$0xff]
      %v686 = vld [vmem:[%s650 + $0x118] sm:$0xff]
      %v687 = vld [vmem:[%s650 + $0x120] sm:$0xff]
      %v688 = vld [vmem:[%s650 + $0x128] sm:$0xff]
      %v689 = vld [vmem:[%s650 + $0x130] sm:$0xff]
      %v690 = vld [vmem:[%s650 + $0x138] sm:$0xff]
      %v691 = vld [vmem:[%s650 + $0x140] sm:$0xff]
      %v692 = vld [vmem:[%s650 + $0x148] sm:$0xff]
      %v693 = vld [vmem:[%s650 + $0x150] sm:$0xff]
      %v694 = vld [vmem:[%s650 + $0x158] sm:$0xff]
      %v695 = vld [vmem:[%s650 + $0x160] sm:$0x3]
      %v696 = vld [vmem:[%s650 + $0x168] sm:$0x3]
      %v697 = vld [vmem:[%s650 + $0x170] sm:$0x3]
      %v698 = vld [vmem:[%s650 + $0x178] sm:$0x3]
      %v700 = vsel %vm333, %v649, 0
      %v703 = vsel %vm337, %v695, 0
      %v706 = vsel %vm337, %v696, 0
      %v709 = vsel %vm337, %v697, 0
      %v712 = vsel %vm337, %v698, 0
      %714 = vmatprep.subr.mxu0 %v652
      %715 = vmatpush1.msra.mxu0 %v651
      %716 = vmatprep.subr.mxu0 %v656
      %717 = vmatpush1.msra.mxu0 %v655
      %718 = vmatprep.subr.mxu0 %v660
      %719 = vmatpush1.msra.mxu0 %v659
      %720 = vmatprep.subr.mxu0 %v664
      %721 = vmatpush1.msra.mxu0 %v663
      %722 = vmatprep.subr.mxu0 %v668
      %723 = vmatpush1.msra.mxu0 %v667
      %724 = vmatprep.subr.mxu0 %v672
      %725 = vmatpush1.msra.mxu0 %v671
      %726 = vmatprep.subr.mxu0 %v676
      %727 = vmatpush1.msra.mxu0 %v675
      %728 = vmatprep.subr.mxu0 %v680
      %729 = vmatpush1.msra.mxu0 %v679
      %730 = vmatprep.subr.mxu0 %v684
      %731 = vmatpush1.msra.mxu0 %v683
      %732 = vmatprep.subr.mxu0 %v688
      %733 = vmatpush1.msra.mxu0 %v687
      %734 = vmatprep.subr.mxu0 %v692
      %735 = vmatpush1.msra.mxu0 %v691
      %736 = vmatprep.subr.mxu0 %v706
      %737 = vmatpush1.msra.mxu0 %v703
      %738 = vmatprep.subr.mxu0 0.0
      %739 = vmatpush1.msra.mxu0 0.0
      %740 = vmatprep.subr.mxu0 0.0
      %741 = vmatpush1.msra.mxu0 0.0
      %742 = vmatprep.subr.mxu0 0.0
      %743 = vmatpush1.msra.mxu0 0.0
      %744 = vmatprep.subr.mxu0 0.0
      %745 = vmatpush1.msra.mxu0 0.0
      %746 = vmatprep.subr.mxu0 0.0
      %747 = vmatpush1.msra.mxu0 0.0
      %748 = vmatprep.subr.mxu0 0.0
      %749 = vmatpush1.msra.mxu0 0.0
      %750 = vmatprep.subr.mxu0 0.0
      %751 = vmatpush1.msra.mxu0 0.0
      %752 = vmatprep.subr.mxu0 0.0
      %753 = vmatpush1.msra.mxu0 0.0
      %754 = vmatprep.subr.mxu0 0.0
      %755 = vmatpush1.msra.mxu0 0.0
      %756 = vmatprep.subr.mxu0 0.0
      %757 = vmatpush1.msra.mxu0 0.0
      %758 = vmatprep.subr.mxu0 0.0
      %759 = vmatpush1.msra.mxu0 0.0
      %760 = vmatprep.subr.mxu0 0.0
      %761 = vmatpush1.msra.mxu0 0.0
      %762 = vmatprep.subr.mxu0 0.0
      %763 = vmatpush1.msra.mxu0 0.0
      %764 = vmatprep.subr.mxu0 0.0
      %765 = vmatpush1.msra.mxu0 0.0
      %766 = vmatprep.subr.mxu0 0.0
      %767 = vmatpush1.msra.mxu0 0.0
      %768 = vmatprep.subr.mxu0 0.0
      %769 = vmatpush1.msra.mxu0 0.0
      %770 = vmatprep.subr.mxu0 0.0
      %771 = vmatpush1.msra.mxu0 0.0
      %772 = vmatprep.subr.mxu0 0.0
      %773 = vmatpush1.msra.mxu0 0.0
      %774 = vmatprep.subr.mxu0 0.0
      %775 = vmatpush1.msra.mxu0 0.0
      %776 = vmatprep.subr.mxu0 0.0
      %777 = vmatpush1.msra.mxu0 0.0
      %778 = vmatprep.mubr.f32.mxu0 0.0
      %779 = vmatmul.mubr.f32.gmra.mrb[0].mxu0 %v700
      %v780 = vpop.f32.mrb[0].mxu0
      %v781 = vadd.f32 0.0, %v780
      %v782 = vpop.f32.mrb[0].mxu0
      %v783 = vadd.f32 0.0, %v782
      %784 = vdwg.mxu0
      %785 = vmatprep.subr.mxu0 %v654
      %786 = vmatpush1.msra.mxu0 %v653
      %787 = vmatprep.subr.mxu0 %v658
      %788 = vmatpush1.msra.mxu0 %v657
      %789 = vmatprep.subr.mxu0 %v662
      %790 = vmatpush1.msra.mxu0 %v661
      %791 = vmatprep.subr.mxu0 %v666
      %792 = vmatpush1.msra.mxu0 %v665
      %793 = vmatprep.subr.mxu0 %v670
      %794 = vmatpush1.msra.mxu0 %v669
      %795 = vmatprep.subr.mxu0 %v674
      %796 = vmatpush1.msra.mxu0 %v673
      %797 = vmatprep.subr.mxu0 %v678
      %798 = vmatpush1.msra.mxu0 %v677
      %799 = vmatprep.subr.mxu0 %v682
      %800 = vmatpush1.msra.mxu0 %v681
      %801 = vmatprep.subr.mxu0 %v686
      %802 = vmatpush1.msra.mxu0 %v685
      %803 = vmatprep.subr.mxu0 %v690
      %804 = vmatpush1.msra.mxu0 %v689
      %805 = vmatprep.subr.mxu0 %v694
      %806 = vmatpush1.msra.mxu0 %v693
      %807 = vmatprep.subr.mxu0 %v712
      %808 = vmatpush1.msra.mxu0 %v709
      %809 = vmatprep.subr.mxu0 0.0
      %810 = vmatpush1.msra.mxu0 0.0
      %811 = vmatprep.subr.mxu0 0.0
      %812 = vmatpush1.msra.mxu0 0.0
      %813 = vmatprep.subr.mxu0 0.0
      %814 = vmatpush1.msra.mxu0 0.0
      %815 = vmatprep.subr.mxu0 0.0
      %816 = vmatpush1.msra.mxu0 0.0
      %817 = vmatprep.subr.mxu0 0.0
      %818 = vmatpush1.msra.mxu0 0.0
      %819 = vmatprep.subr.mxu0 0.0
      %820 = vmatpush1.msra.mxu0 0.0
      %821 = vmatprep.subr.mxu0 0.0
      %822 = vmatpush1.msra.mxu0 0.0
      %823 = vmatprep.subr.mxu0 0.0
      %824 = vmatpush1.msra.mxu0 0.0
      %825 = vmatprep.subr.mxu0 0.0
      %826 = vmatpush1.msra.mxu0 0.0
      %827 = vmatprep.subr.mxu0 0.0
      %828 = vmatpush1.msra.mxu0 0.0
      %829 = vmatprep.subr.mxu0 0.0
      %830 = vmatpush1.msra.mxu0 0.0
      %831 = vmatprep.subr.mxu0 0.0
      %832 = vmatpush1.msra.mxu0 0.0
      %833 = vmatprep.subr.mxu0 0.0
      %834 = vmatpush1.msra.mxu0 0.0
      %835 = vmatprep.subr.mxu0 0.0
      %836 = vmatpush1.msra.mxu0 0.0
      %837 = vmatprep.subr.mxu0 0.0
      %838 = vmatpush1.msra.mxu0 0.0
      %839 = vmatprep.subr.mxu0 0.0
      %840 = vmatpush1.msra.mxu0 0.0
      %841 = vmatprep.subr.mxu0 0.0
      %842 = vmatpush1.msra.mxu0 0.0
      %843 = vmatprep.subr.mxu0 0.0
      %844 = vmatpush1.msra.mxu0 0.0
      %845 = vmatprep.subr.mxu0 0.0
      %846 = vmatpush1.msra.mxu0 0.0
      %847 = vmatprep.subr.mxu0 0.0
      %848 = vmatpush1.msra.mxu0 0.0
      %849 = vmatprep.mubr.f32.mxu0 0.0
      %850 = vmatmul.mubr.f32.gmra.mrb[0].mxu0 %v700
      %v851 = vpop.f32.mrb[0].mxu0
      %v852 = vadd.f32 0.0, %v851
      %v853 = vpop.f32.mrb[0].mxu0
      %v854 = vadd.f32 0.0, %v853
      %855 = vdwg.mxu0
      %v856 = vadd.f32 %v574, %v781
      %v857 = vadd.f32 %v576, %v783
      %v858 = vadd.f32 %v645, %v852
      %v859 = vadd.f32 %v647, %v854
      %v860 = vld [vmem:[%s2] sm:$0xf]
      %v862 = vlaneseq
      %v863 = vshrl.u32 %v862, 7
      %v864 = vsub.s32 0, %v863
      %v865 = vrot.slane %v860, %v864
      %v866 = vlaneseq
      %v867 = vshrl.u32 %v866, 7
      %v868 = vsub.s32 1, %v867
      %v869 = vrot.slane %v860, %v868
      %v870 = vlaneseq
      %v871 = vshrl.u32 %v870, 7
      %v872 = vsub.s32 2, %v871
      %v873 = vrot.slane %v860, %v872
      %v874 = vlaneseq
      %v875 = vshrl.u32 %v874, 7
      %v876 = vsub.s32 3, %v875
      %v877 = vrot.slane %v860, %v876
      %v882 = vmul.f32 %v856, %v865
      %v883 = vmul.f32 %v857, %v869
      %v884 = vmul.f32 %v858, %v873
      %v885 = vmul.f32 %v859, %v877
      %v886 = vld [vmem:[%s3] sm:$0xf]
      %v888 = vlaneseq
      %v889 = vshrl.u32 %v888, 7
      %v890 = vsub.s32 0, %v889
      %v891 = vrot.slane %v886, %v890
      %v892 = vlaneseq
      %v893 = vshrl.u32 %v892, 7
      %v894 = vsub.s32 1, %v893
      %v895 = vrot.slane %v886, %v894
      %v896 = vlaneseq
      %v897 = vshrl.u32 %v896, 7
      %v898 = vsub.s32 2, %v897
      %v899 = vrot.slane %v886, %v898
      %v900 = vlaneseq
      %v901 = vshrl.u32 %v900, 7
      %v902 = vsub.s32 3, %v901
      %v903 = vrot.slane %v886, %v902
      %v908 = vadd.f32 %v882, %v891
      %v909 = vadd.f32 %v883, %v895
      %v910 = vadd.f32 %v884, %v899
      %v911 = vadd.f32 %v885, %v903
      %v912 = vmax.f32 %v908, 0.0
      %v913 = vmax.f32 %v909, 0.0
      %v914 = vmax.f32 %v910, 0.0
      %v915 = vmax.f32 %v911, 0.0
      %916 = vst [vmem:[%s233] sm:$0xff] %v912
      %917 = vst [vmem:[%s233 + $0x8] sm:$0xff] %v913
      %918 = vst [vmem:[%s233 + $0x10] sm:$0xff] %v914
      %919 = vst [vmem:[%s233 + $0x18] sm:$0xff] %v915
      %p920 = scmp.lt.s32.totalorder %s19, 1
      %s921 = scalar_select %p920, %s19, 1
      %p922 = scmp.lt.s32.totalorder %s20, 1
      %s923 = scalar_select %p922, %s20, 1
      %s924 = smul.addr %s923, 4
      %s925 = smul.addr %s921, 8
      %s926 = sadd.s32 %s924, %s925
      %s927 = smul.addr %s926, 8
      %s928 = scalar_lea.vmem %s4, %s927
      // Predicated region
      $region37: #{upsample_forward.1} parent=35 // pred_check
        %p929 = pneg %p138
      $region38: #{upsample_forward.1} parent=35 // pred_check_branch
        %931 = sbr.rel (%p929) target = $region40
      $region39: #{upsample_forward.1} parent=35 // pred_region
        _
      $region40: #{upsample_forward.1} parent=35 // pred_fallthru
        _
    $region36: #{upsample_forward.1} parent=5 // pred_fallthru
      _
    %p932 = scmp.le.s32.totalorder 2, %s10
    // Predicated region
    $region41: #{upsample_forward.1} parent=5 // pred_check
      %p933 = pneg %p932
    $region42: #{upsample_forward.1} parent=5 // pred_check_branch
      %935 = sbr.rel (%p933) target = $region44
    $region43: #{upsample_forward.1} parent=5 // pred_region
      %s936 = ssub.s32 %s10, 2
      // Predicated region
      $region45: #{upsample_forward.1} parent=43 // pred_check
        %p937 = pneg %p144
      $region46: #{upsample_forward.1} parent=43 // pred_check_branch
        %939 = sbr.rel (%p937) target = $region48
      $region47: #{upsample_forward.1} parent=43 // pred_region
        %p940 = scmp.lt.s32.totalorder %s21, 1
        %s941 = scalar_select %p940, %s21, 1
        %p942 = scmp.lt.s32.totalorder %s22, 1
        %s943 = scalar_select %p942, %s22, 1
        %s944 = smul.addr %s943, 4
        %s945 = smul.addr %s941, 8
        %s946 = sadd.s32 %s944, %s945
        %s947 = smul.addr %s946, 8
        %s948 = scalar_lea.vmem %s4, %s947
      $region48: #{upsample_forward.1} parent=43 // pred_fallthru
        _
    $region44: #{upsample_forward.1} parent=5 // pred_fallthru
      _
  $region6: #{upsample_forward.1} parent=0 // loop_footer
    %s14 = sadd.s32 1, %s10
  $region7: #{upsample_forward.1} parent=0 // loop_footer_branch
    %9 = sbr.rel target = $region3
  $region8: #{upsample_forward.1} parent=0 // loop_exit
    _

</llo_original>
